<compile_context>
chip_gen: v7x
topology: tpu7x:2x2x1
jax: 0.10.0
libtpu: 0.0.40
codegen_flags: <defaults>
</compile_context>

<pallas_src>
import functools

import jax
import jax.numpy as jnp
from jax.experimental import pallas as pl
from jax.experimental.pallas import tpu as pltpu


def _round_up(x, m):
    return (x + m - 1) // m * m


# --------------------------------------------------------------------------
# Kernels
# --------------------------------------------------------------------------
def _propagator_kernel(x_ref, w_ref, b_ref, o_ref):
    # relu(x @ W_t + b)  -- MXU operands in w_ref.dtype (bf16), f32 accumulate.
    x = x_ref[...].astype(w_ref.dtype)
    acc = jnp.dot(x, w_ref[...], preferred_element_type=jnp.float32)
    acc = acc + b_ref[...]                      # [1, out] broadcasts over rows
    o_ref[...] = jnp.maximum(acc, 0.0).astype(o_ref.dtype)


def _propagator_residual_kernel(x_ref, w_ref, b_ref, r_ref, o_ref):
    # relu(x @ W_t + b + res)
    x = x_ref[...].astype(w_ref.dtype)
    acc = jnp.dot(x, w_ref[...], preferred_element_type=jnp.float32)
    acc = acc + b_ref[...] + r_ref[...].astype(jnp.float32)
    o_ref[...] = jnp.maximum(acc, 0.0).astype(o_ref.dtype)


# --------------------------------------------------------------------------
# pallas_call wrapper
# --------------------------------------------------------------------------
_VMEM_BUDGET = 16 * 1024 * 1024   # conservative working-set budget (all gens)
_VMEM_LIMIT = 32 * 1024 * 1024    # explicit scoped-VMEM limit (safe on v7x too)


def _choose_row_tile(n, k, out_p, has_res):
    """Largest row tile (multiple of 8, <=512) whose double-buffered tiles fit."""
    resident = 2 * (k * out_p * 2 + out_p * 4)                 # weight(bf16) + bias(f32)
    per_row = 2 * 4 * (k + out_p + (out_p if has_res else 0))  # dbl-buffered f32 tiles
    budget = max(_VMEM_BUDGET - resident, 8 * per_row)
    tm = min(512, budget // per_row)
    tm = max(8, (tm // 8) * 8)
    if tm >= n:
        return n, 1               # single block == full row extent (no 8-divisibility needed)
    return tm, pl.cdiv(n, tm)     # partial last block is masked by Pallas on write


def propagator_forward(x, w_t, b2, res=None):
    """x: [N, in] f32, w_t: [in, out_pad] (bf16), b2: [1, out_pad] f32,
    res: [N, out_pad] or None.  Returns [N, out_pad] in x.dtype."""
    n, k = x.shape
    k_w, out_p = w_t.shape
    assert k == k_w, (k, k_w)
    has_res = res is not None

    tm, n_tiles = _choose_row_tile(n, k, out_p, has_res)
    # TODO(synk): add a K-reduction grid + f32 VMEM accumulator if
    # in_size * out_size ever grows past the resident-weight VMEM budget.

    row_spec = lambda cols: pl.BlockSpec((tm, cols), lambda i: (i, 0))
    pinned = lambda shape: pl.BlockSpec(shape, lambda i: (0, 0))

    in_specs = [row_spec(k), pinned((k, out_p)), pinned((1, out_p))]
    args = [x, w_t, b2]
    kernel = _propagator_kernel
    if has_res:
        in_specs.append(row_spec(out_p))
        args.append(res)
        kernel = _propagator_residual_kernel

    bytes_accessed = (x.size * 4 + w_t.size * 2 + b2.size * 4 + n * out_p * 4
                      + (res.size * 4 if has_res else 0))
    cost = pl.CostEstimate(flops=2 * n * k * out_p, transcendentals=0,
                           bytes_accessed=bytes_accessed)

    return pl.pallas_call(
        kernel,
        out_shape=jax.ShapeDtypeStruct((n, out_p), x.dtype),
        grid=(n_tiles,),
        in_specs=in_specs,
        out_specs=row_spec(out_p),
        compiler_params=pltpu.CompilerParams(
            dimension_semantics=("parallel",),   # row tiles split across TCs on v7x
            vmem_limit_bytes=_VMEM_LIMIT,
        ),
        cost_estimate=cost,
    )(*args)


@functools.partial(jax.jit, static_argnames=("output_size",))
def _propagator_apply(x, w_t, b2, res, output_size):
    """Single jitted program: (optional res pad) -> pallas matmul -> unpad."""
    out_pad = w_t.shape[1]
    if res is not None:
        pad = out_pad - output_size
        if pad:
            res = jnp.pad(res, ((0, 0), (0, pad)))
    y = propagator_forward(x, w_t, b2, res=res)
    if out_pad != output_size:
        y = y[:, :output_size]
    return y


# --------------------------------------------------------------------------
# Module
# --------------------------------------------------------------------------
class Propagator:
    """JAX/Pallas mirror of the PyTorch Propagator module."""

    def __init__(self, input_size, output_size, residual=False, key=None,
                 mxu_dtype=jnp.bfloat16):
        self.residual = residual
        self.input_size = input_size
        self.output_size = output_size
        if key is None:
            key = jax.random.PRNGKey(0)
        kw, kb = jax.random.split(key)
        # PyTorch-layout reference parameters (f32), mimicking nn.Linear's
        # U(-1/sqrt(in), 1/sqrt(in)) init.
        bound = 1.0 / (input_size ** 0.5)
        self.weight = jax.random.uniform(
            kw, (output_size, input_size), jnp.float32, -bound, bound)
        self.bias = jax.random.uniform(
            kb, (output_size,), jnp.float32, -bound, bound)

        # Kernel-layout parameters, built ONCE (hoisted out of the call path):
        #   * transposed to [in, out] so the kernel is a plain x @ W_t,
        #   * out features zero-padded to a multiple of 128 (lane-dense
        #     loads/stores, full MXU panels),
        #   * weight cast to bf16 for the MXU; bias kept f32 for the epilogue.
        self.out_pad = _round_up(output_size, 128)
        w_t = jnp.zeros((input_size, self.out_pad), jnp.float32)
        w_t = w_t.at[:, :output_size].set(self.weight.T)
        self.w_t = w_t.astype(mxu_dtype)
        b2 = jnp.zeros((1, self.out_pad), jnp.float32)
        self.b2 = b2.at[:, :output_size].set(self.bias.reshape(1, output_size))

    def __call__(self, x, res=None):
        if self.residual:
            if res is None:
                raise ValueError("residual Propagator requires `res`")
            return _propagator_apply(x, self.w_t, self.b2, res,
                                     output_size=self.output_size)
        return _propagator_apply(x, self.w_t, self.b2, None,
                                 output_size=self.output_size)


if __name__ == "__main__":
    key = jax.random.PRNGKey(0)
    k_x, k_r, k_p1, k_p2, k_x2 = jax.random.split(key, 5)

    # --- Small, module-typical shapes (n_particles x features) -------------
    n_particles, input_size, output_size = 16, 32, 64
    x = jax.random.normal(k_x, (n_particles, input_size), jnp.float32)
    res = jax.random.normal(k_r, (n_particles, output_size), jnp.float32)

    prop = Propagator(input_size, output_size, residual=False, key=k_p1)
    y = prop(x)
    prop_res = Propagator(input_size, output_size, residual=True, key=k_p2)
    y_res = prop_res(x, res=res)
    jax.block_until_ready((y, y_res))

    ref = jnp.maximum(x @ prop.weight.T + prop.bias, 0.0)
    ref_res = jnp.maximum(x @ prop_res.weight.T + prop_res.bias + res, 0.0)
    assert y.shape == (n_particles, output_size)
    assert y_res.shape == (n_particles, output_size)
    # bf16 MXU operands with f32 accumulation -> loosened tolerance vs f32 ref.
    assert jnp.allclose(y, ref, atol=5e-2), "non-residual mismatch"
    assert jnp.allclose(y_res, ref_res, atol=5e-2), "residual mismatch"

    # --- Larger, 128-aligned shapes: exercises the multi-tile row grid -----
    n_big, in_big, out_big = 1024, 128, 256
    xb = jax.random.normal(k_x2, (n_big, in_big), jnp.float32)
    prop_big = Propagator(in_big, out_big, residual=False, key=k_p1)
    yb = prop_big(xb)
    jax.block_until_ready(yb)
    ref_b = jnp.maximum(xb @ prop_big.weight.T + prop_big.bias, 0.0)
    assert yb.shape == (n_big, out_big)
    assert jnp.allclose(yb, ref_b, atol=5e-2), "big-shape mismatch"

    print("KERNEL_OK")
</pallas_src>

<mosaic_0001>
module attributes {stable_mosaic.version = 11 : i64} {
  func.func @_propagator_kernel(%arg0: i32, %arg1: memref<16x32xf32, #tpu.memory_space<vmem>>, %arg2: memref<32x128xbf16, #tpu.memory_space<vmem>>, %arg3: memref<1x128xf32, #tpu.memory_space<vmem>>, %arg4: memref<16x128xf32, #tpu.memory_space<vmem>>) attributes {dimension_semantics = [#tpu.dimension_semantics<parallel>], iteration_bounds = array<i64: 1>, scalar_prefetch = 0 : i64, scratch_operands = 0 : i64, tpu.core_type = #tpu.core_type<tc>, window_params = [{transform_indices = @transform_0, window_bounds = array<i64: 16, 32>}, {pipeline_mode = #tpu.pipeline_mode<synchronous>, transform_indices = @transform_1, window_bounds = array<i64: 32, 128>}, {pipeline_mode = #tpu.pipeline_mode<synchronous>, transform_indices = @transform_2, window_bounds = array<i64: 1, 128>}, {transform_indices = @transform_3, window_bounds = array<i64: 16, 128>}]} {
    %c0 = arith.constant 0 : index
    %c0_0 = arith.constant 0 : index
    %0 = vector.load %arg1[%c0, %c0_0] : memref<16x32xf32, #tpu.memory_space<vmem>>, vector<16x32xf32>
    %1 = arith.truncf %0 : vector<16x32xf32> to vector<16x32xbf16>
    %c0_1 = arith.constant 0 : index
    %c0_2 = arith.constant 0 : index
    %2 = vector.load %arg2[%c0_1, %c0_2] : memref<32x128xbf16, #tpu.memory_space<vmem>>, vector<32x128xbf16>
    %cst = arith.constant dense<0.000000e+00> : vector<16x128xf32>
    %3 = tpu.matmul %1, %2, %cst {dimension_numbers = #tpu.dot_dimension_numbers<[1], [0], [0], [1], [0, 0, 1, 1], [], []>} : vector<16x32xbf16>, vector<32x128xbf16>, vector<16x128xf32> -> vector<16x128xf32>
    %c0_3 = arith.constant 0 : index
    %c0_4 = arith.constant 0 : index
    %4 = vector.load %arg3[%c0_3, %c0_4] : memref<1x128xf32, #tpu.memory_space<vmem>>, vector<1x128xf32>
    %5 = vector.broadcast %4 : vector<1x128xf32> to vector<16x128xf32>
    %6 = arith.addf %3, %5 : vector<16x128xf32>
    %cst_5 = arith.constant 0.000000e+00 : f32
    %7 = vector.broadcast %cst_5 : f32 to vector<16x128xf32>
    %8 = arith.maximumf %6, %7 : vector<16x128xf32>
    %c0_6 = arith.constant 0 : index
    %c0_7 = arith.constant 0 : index
    %9 = vector.load %arg4[%c0_6, %c0_7] : memref<16x128xf32, #tpu.memory_space<vmem>>, vector<16x128xf32>
    tpu.vector_store %arg4[%c0_6, %c0_7], %8 {strides = array<i32>} : memref<16x128xf32, #tpu.memory_space<vmem>>, vector<16x128xf32>,
    return
  }
  func.func @transform_0(%arg0: i32) -> (i32, i32) {
    %c0_i32 = arith.constant 0 : i32
    %c0_i32_0 = arith.constant 0 : i32
    return %arg0, %c0_i32 : i32, i32
  }
  func.func @transform_1(%arg0: i32) -> (i32, i32) {
    %c0_i32 = arith.constant 0 : i32
    %c0_i32_0 = arith.constant 0 : i32
    %c0_i32_1 = arith.constant 0 : i32
    return %c0_i32, %c0_i32_0 : i32, i32
  }
  func.func @transform_2(%arg0: i32) -> (i32, i32) {
    %c0_i32 = arith.constant 0 : i32
    %c0_i32_0 = arith.constant 0 : i32
    %c0_i32_1 = arith.constant 0 : i32
    return %c0_i32, %c0_i32_0 : i32, i32
  }
  func.func @transform_3(%arg0: i32) -> (i32, i32) {
    %c0_i32 = arith.constant 0 : i32
    %c0_i32_0 = arith.constant 0 : i32
    return %arg0, %c0_i32 : i32, i32
  }
}

</mosaic_0001>

<llo_original>
// kernel: _propagator_apply.1
$region0: #{_propagator_apply.1}
  #allocation0 [shape = 'u32[]', space=smem, size = 0x4, offset = 0x4, fixed_abs, tag = 'smem constant byte address 0x4 - core index']
  #allocation1 [shape = 'u32[144,128]{1,0:T(1,128)}', space=vmem, size = 0x12000, scoped, tag = 'internal scratch']
  %s0 = inlined_call_operand.hbm [shape: f32[16,32], index: 0, kind: input, shape index: {}]
  %s1 = inlined_call_operand.hbm [shape: bf16[32,128], index: 1, kind: input, shape index: {}]
  %s2 = inlined_call_operand.vmem [shape: f32[1,128], index: 2, kind: input, shape index: {}]
  %s3 = inlined_call_operand.hbm [shape: f32[16,128], index: 3, kind: output, shape index: {}]
  %s4 = sld [smem:[#allocation0]]
  $region30: #{_propagator_apply.1} parent=0
    _
  %s6 = ssub.s32 1, %s4
  %s7 = scalar_select 0, %s6, %s4
  $region1: #{_propagator_apply.1} parent=0
    #allocation2 [shape = 'u8[8192]{0}', space=vmem, size = 0x2000, scoped, tag = 'input window, operand 0, single buffered']
    #allocation3 [shape = 's32[1]{0}', space=sflag, size = 0x4, scoped, tag = 'scoped memory for _propagator_apply.1']
    #allocation4 [shape = 's32[1]{0}', space=sflag, size = 0x4, scoped, tag = 'scoped memory for _propagator_apply.1']
    #allocation5 [shape = 'u8[8192]{0}', space=vmem, size = 0x2000, scoped, tag = 'input window, operand 1, single buffered']
    #allocation6 [shape = 's32[1]{0}', space=sflag, size = 0x4, scoped, tag = 'scoped memory for _propagator_apply.1']
    #allocation7 [shape = 'u8[8192]{0}', space=vmem, size = 0x2000, scoped, tag = 'output window, operand 0, single buffered']
    %8 = vsyncpa [#allocation3], 0
    %9 = vsyncpa [#allocation6], 0
    %10 = vsyncpa [#allocation4], 0
    // Predicated region
    $region2: #{_propagator_apply.1} parent=1 // pred_check
      _
    $region3: #{_propagator_apply.1} parent=1 // pred_check_branch
      %12 = sbr.rel (0) target = $region5
    $region4: #{_propagator_apply.1} parent=1 // pred_region
      %s14 = ssub.s32 256, 256
      %15 = vsyncadd [#allocation3], %s14
      %s16 = sshll.u32 [#allocation2], 4
      %s17 = int_to_ptr.vmem [resolvable:$true] %s16
      %22 = dma.hbm_to_vmem [thread:$0]  %s0, 256, %s17, [#allocation3], 128, 128, 8
    $region5: #{_propagator_apply.1} parent=1 // pred_fallthru
      _
    // Predicated region
    $region6: #{_propagator_apply.1} parent=1 // pred_check
      _
    $region7: #{_propagator_apply.1} parent=1 // pred_check_branch
      %24 = sbr.rel (0) target = $region9
    $region8: #{_propagator_apply.1} parent=1 // pred_region
      %s26 = ssub.s32 256, 256
      %27 = vsyncadd [#allocation6], %s26
      %s28 = sshll.u32 [#allocation5], 4
      %s29 = int_to_ptr.vmem [resolvable:$true] %s28
      %34 = dma.hbm_to_vmem [thread:$0]  %s1, 256, %s29, [#allocation6], 64, 64, 4
    $region9: #{_propagator_apply.1} parent=1 // pred_fallthru
      _
    // Predicated region
    $region10: #{_propagator_apply.1} parent=1 // pred_check
      _
    $region11: #{_propagator_apply.1} parent=1 // pred_check_branch
      %36 = sbr.rel (0) target = $region13
    $region12: #{_propagator_apply.1} parent=1 // pred_region
      _
    $region13: #{_propagator_apply.1} parent=1 // pred_fallthru
      _
    // Predicated region
    $region14: #{_propagator_apply.1} parent=1 // pred_check
      _
    $region15: #{_propagator_apply.1} parent=1 // pred_check_branch
      %38 = sbr.rel (0) target = $region17
    $region16: #{_propagator_apply.1} parent=1 // pred_region
      %39 = dma.done [#allocation3], 256
    $region17: #{_propagator_apply.1} parent=1 // pred_fallthru
      _
    // Predicated region
    $region18: #{_propagator_apply.1} parent=1 // pred_check
      _
    $region19: #{_propagator_apply.1} parent=1 // pred_check_branch
      %41 = sbr.rel (0) target = $region21
    $region20: #{_propagator_apply.1} parent=1 // pred_region
      %42 = dma.done [#allocation6], 256
    $region21: #{_propagator_apply.1} parent=1 // pred_fallthru
      _
    %v44 = vld [vmem:[#allocation2] sm:$0xff]
    %v45 = vld [vmem:[#allocation2 + $0x8] sm:$0xff]
    %v46 = vpack.c.bf16 %v45, %v44
    %v47 = vld [vmem:[#allocation5] sm:$0xf]
    %v48 = vld [vmem:[#allocation5 + $0x4] sm:$0xf]
    %v49 = vld [vmem:[#allocation5 + $0x8] sm:$0xf]
    %v50 = vld [vmem:[#allocation5 + $0xc] sm:$0xf]
    %v51 = vld [vmem:[%s2] sm:$0x1]
    %v53 = vlaneseq
    %v54 = vshrl.u32 %v53, 7
    %v55 = vsub.s32 0, %v54
    %v56 = vrot.slane %v51, %v55
    %v62 = vunpack.c.l.b16 %v47
    %v63 = vunpack.c.l.b16 %v48
    %v64 = vunpack.c.l.b16 %v49
    %v65 = vunpack.c.l.b16 %v50
    %v66 = vpack.c.b16 %v63, %v62
    %v67 = vpack.c.b16 %v65, %v64
    %vm70 = vcmask 261120
    %v72 = vsel %vm70, %v46, 0
    %74 = vmatprep.subr.bf16.mxu0 0
    %75 = vmatpush1.bf16.msra.mxu0 %v66
    %76 = vmatprep.subr.bf16.mxu0 0
    %77 = vmatpush1.bf16.msra.mxu0 %v67
    %78 = vmatprep.subr.bf16.mxu0 0
    %79 = vmatpush1.bf16.msra.mxu0 0
    %80 = vmatprep.subr.bf16.mxu0 0
    %81 = vmatpush1.bf16.msra.mxu0 0
    %82 = vmatprep.subr.bf16.mxu0 0
    %83 = vmatpush1.bf16.msra.mxu0 0
    %84 = vmatprep.subr.bf16.mxu0 0
    %85 = vmatpush1.bf16.msra.mxu0 0
    %86 = vmatprep.subr.bf16.mxu0 0
    %87 = vmatpush1.bf16.msra.mxu0 0
    %88 = vmatprep.subr.bf16.mxu0 0
    %89 = vmatpush1.bf16.msra.mxu0 0
    %90 = vmatprep.subr.bf16.mxu0 0
    %91 = vmatpush1.bf16.msra.mxu0 0
    %92 = vmatprep.subr.bf16.mxu0 0
    %93 = vmatpush1.bf16.msra.mxu0 0
    %94 = vmatprep.subr.bf16.mxu0 0
    %95 = vmatpush1.bf16.msra.mxu0 0
    %96 = vmatprep.subr.bf16.mxu0 0
    %97 = vmatpush1.bf16.msra.mxu0 0
    %98 = vmatprep.subr.bf16.mxu0 0
    %99 = vmatpush1.bf16.msra.mxu0 0
    %100 = vmatprep.subr.bf16.mxu0 0
    %101 = vmatpush1.bf16.msra.mxu0 0
    %102 = vmatprep.subr.bf16.mxu0 0
    %103 = vmatpush1.bf16.msra.mxu0 0
    %104 = vmatprep.subr.bf16.mxu0 0
    %105 = vmatpush1.bf16.msra.mxu0 0
    %106 = vmatprep.mubr.bf16.mxu0 0
    %107 = vmatmul.mubr.bf16.gmra.mrb[0].mxu0 %v72
    %v108 = vpop.f32.mrb[0].mxu0
    %v109 = vadd.f32 %v56, %v108
    %v110 = vpop.f32.mrb[0].mxu0
    %v111 = vpop.f32.mrb[0].mxu0
    %v112 = vadd.f32 %v56, %v111
    %v113 = vpop.f32.mrb[0].mxu0
    %114 = vdwg.mxu0
    %v115 = vmax.f32 %v109, 0.0
    %v116 = vmax.f32 %v112, 0.0
    %117 = vst [vmem:[#allocation7] sm:$0xff] %v115
    %118 = vst [vmem:[#allocation7 + $0x8] sm:$0xff] %v116
    // Predicated region
    $region22: #{_propagator_apply.1} parent=1 // pred_check
      _
    $region23: #{_propagator_apply.1} parent=1 // pred_check_branch
      %120 = sbr.rel (0) target = $region25
    $region24: #{_propagator_apply.1} parent=1 // pred_region
      %s122 = ssub.s32 256, 256
      %123 = vsyncadd [#allocation4], %s122
      %s124 = sshll.u32 [#allocation7], 4
      %s125 = int_to_ptr.vmem [resolvable:$true] %s124
      %130 = dma.vmem_to_hbm [thread:$0]  %s125, 256, %s3, [#allocation4], 128, 128, 8
    $region25: #{_propagator_apply.1} parent=1 // pred_fallthru
      _
    // Predicated region
    $region26: #{_propagator_apply.1} parent=1 // pred_check
      _
    $region27: #{_propagator_apply.1} parent=1 // pred_check_branch
      %132 = sbr.rel (0) target = $region29
    $region28: #{_propagator_apply.1} parent=1 // pred_region
      %133 = dma.done [#allocation4], 256
    $region29: #{_propagator_apply.1} parent=1 // pred_fallthru
      _
    %134 = vsyncpa [#allocation3], 1
    %135 = vsyncpa [#allocation6], 1
    %136 = vsyncpa [#allocation4], 1

</llo_original>
